<compile_context>
chip_gen: v6e
topology: v6e:2x2x1
jax: 0.10.0
libtpu: 0.0.40
codegen_flags: <defaults>
</compile_context>

<pallas_src>
import math

import jax
import jax.numpy as jnp
from jax import lax
from jax.experimental import pallas as pl
from jax.experimental.pallas import tpu as pltpu

LN_EPS = 1e-5
RESIDENT_FEATS_BUDGET = 8 * 1024 * 1024   # bf16 bytes; conservative for v7x (64 MiB/TC)


def _round_up(v, m):
    return ((v + m - 1) // m) * m


def _lcm(a, b):
    return a * b // math.gcd(a, b)


# ---------------------------------------------------------------------------
# Kernel 1 (only when d_pad < din_pad): XW = (D^-1/2 X) @ W, row tiled, bf16.
# ---------------------------------------------------------------------------
def _xw_kernel(x_ref, w_ref, o_ref):
    o_ref[...] = jnp.dot(
        x_ref[...], w_ref[...], preferred_element_type=jnp.float32
    ).astype(o_ref.dtype)


# ---------------------------------------------------------------------------
# Kernel 2: row-tiled (A+I) aggregation + (optional W) + D^-1/2 row scale +
# bias + LayerNorm.  grid = (row_tiles, k_tiles); k (A-column reduction) is the
# last, "arbitrary" axis; the row axis is "parallel" (2 TCs on v7x).
# ---------------------------------------------------------------------------
def _make_gcn_ln_kernel(dout, apply_w, resident_feats, tk):
    def body(a_ref, f_ref, w_ref, p_ref, dinv_ref, o_ref, acc_ref):
        k = pl.program_id(1)

        @pl.when(k == 0)
        def _():
            acc_ref[...] = jnp.zeros_like(acc_ref)

        # int8 0/1 adjacency tile -> bf16 on the VPU (hidden under the A DMA).
        a_tile = a_ref[...].astype(jnp.bfloat16)
        if resident_feats:
            base = pl.multiple_of(k * tk, tk)
            f_tile = f_ref[pl.ds(base, tk), :]
        else:
            f_tile = f_ref[...]
        acc_ref[...] += jnp.dot(a_tile, f_tile, preferred_element_type=jnp.float32)

        @pl.when(k == pl.num_programs(1) - 1)
        def _():
            acc = acc_ref[...]
            if apply_w:
                h = jnp.dot(acc.astype(jnp.bfloat16), w_ref[...],
                            preferred_element_type=jnp.float32)
            else:
                h = acc
            # fold the D^-1/2 row scale + bias (bias is zero-padded past dout).
            h = h * dinv_ref[...] + p_ref[pl.ds(0, 1), :]
            gamma = p_ref[pl.ds(1, 1), :]
            beta = p_ref[pl.ds(2, 1), :]

            # LayerNorm over the valid (unpadded) channels only; padded lanes
            # stay exactly zero so the final store is a dense 128-lane vst.
            d_pad = h.shape[-1]
            col = lax.broadcasted_iota(jnp.int32, (1, d_pad), 1)
            mask = (col < dout).astype(jnp.float32)
            inv_d = 1.0 / float(dout)
            mean = jnp.sum(h * mask, axis=-1, keepdims=True) * inv_d
            diff = (h - mean) * mask
            var = jnp.sum(diff * diff, axis=-1, keepdims=True) * inv_d
            hn = diff * lax.rsqrt(var + LN_EPS)
            out = hn * gamma + beta   # gamma/beta zero-padded -> pad lanes stay 0
            # act = Identity(); dropout = identity in eval mode; residual=False
            # TODO(synk): training-mode dropout (random mask + 1/(1-p) scale) not applied.
            o_ref[...] = out.astype(o_ref.dtype)

    if apply_w:
        def kernel(a_ref, f_ref, w_ref, p_ref, dinv_ref, o_ref, acc_ref):
            body(a_ref, f_ref, w_ref, p_ref, dinv_ref, o_ref, acc_ref)
    else:
        def kernel(a_ref, f_ref, p_ref, dinv_ref, o_ref, acc_ref):
            body(a_ref, f_ref, None, p_ref, dinv_ref, o_ref, acc_ref)
    return kernel


def conv_block_v1(x, edge_index, w, b, gamma, beta):
    n, din = x.shape
    dout = w.shape[1]

    # ---- padded lane widths -------------------------------------------------
    din_pad = max(128, _round_up(din, 128))
    d_pad = max(128, _round_up(dout, 128))

    # matmul-order decision on PADDED widths; prefer apply_w on ties so the
    # extra XW kernel + HBM round trip is skipped.
    apply_w = din_pad <= d_pad
    feat_dim = din_pad if apply_w else d_pad

    # ---- tiles first, then pad N up to a multiple of them --------------------
    n_min = max(128, _round_up(n, 128))
    tm = min(256, n_min)        # finalize LN stays <= 256 rows -> no vreg spill
    tk = min(1024, n_min)
    n_pad = _round_up(n_min, _lcm(tm, tk))   # never degrade tile size
    # (lcm rounding keeps n_pad//tm a multiple of 4 once n_pad > tk -> both v7x
    #  TensorCores stay busy on the "parallel" row axis.)

    src, dst = edge_index[0], edge_index[1]
    loops = jnp.arange(n, dtype=edge_index.dtype)

    # ---- wrapper glue: int8 (A+I) scattered straight into the padded buffer --
    # TODO(synk): for very large sparse graphs replace this dense O(N^2)
    # adjacency with a scalar-prefetch / DMA-gather sparse aggregation (O(E*C)).
    a01 = jnp.zeros((n_pad, n_pad), jnp.int8)
    a01 = a01.at[jnp.concatenate([dst, loops]),
                 jnp.concatenate([src, loops])].add(jnp.int8(1))

    # degrees from the edge list (O(E), no N^2 pass); D^-1/2 folded into X rows
    # (column scale) and into the kernel finalize (row scale).
    deg = jnp.zeros((n,), jnp.float32).at[dst].add(1.0) + 1.0
    dinv = lax.rsqrt(deg)
    dinv_pad = jnp.zeros((n_pad, 1), jnp.float32).at[:n, 0].set(dinv)

    x_pad = jnp.zeros((n_pad, din_pad), jnp.bfloat16).at[:n, :din].set(
        (x * dinv[:, None]).astype(jnp.bfloat16))
    w_pad = jnp.zeros((din_pad, d_pad), jnp.bfloat16).at[:din, :dout].set(
        w.astype(jnp.bfloat16))
    params = jnp.zeros((3, d_pad), jnp.float32)
    params = params.at[0, :dout].set(b.reshape(-1))
    params = params.at[1, :dout].set(gamma.reshape(-1))
    params = params.at[2, :dout].set(beta.reshape(-1))

    if apply_w:
        feats = x_pad                      # aggregate D^-1/2 X; apply W at finalize
    else:
        # Precompute (D^-1/2 X) W once so the K-reduction streams the narrower
        # (d_pad-wide) matrix instead.
        feats = pl.pallas_call(
            _xw_kernel,
            out_shape=jax.ShapeDtypeStruct((n_pad, d_pad), jnp.bfloat16),
            grid_spec=pltpu.PrefetchScalarGridSpec(
                num_scalar_prefetch=0,
                grid=(n_pad // tm,),
                in_specs=[
                    pl.BlockSpec((tm, din_pad), lambda i: (i, 0)),
                    pl.BlockSpec((din_pad, d_pad), lambda i: (0, 0)),
                ],
                out_specs=pl.BlockSpec((tm, d_pad), lambda i: (i, 0)),
            ),
            compiler_params=pltpu.CompilerParams(
                dimension_semantics=("parallel",),
                vmem_limit_bytes=32 * 1024 * 1024,
            ),
        )(x_pad, w_pad)

    # ---- feats residency + per-call VMEM budget -------------------------------
    resident = (n_pad * feat_dim * 2) <= RESIDENT_FEATS_BUDGET
    if resident:
        f_spec = pl.BlockSpec((n_pad, feat_dim), lambda i, k: (0, 0))
        f_bytes = n_pad * feat_dim * 2 * 2
    else:
        f_spec = pl.BlockSpec((tk, feat_dim), lambda i, k: (k, 0))
        f_bytes = tk * feat_dim * 2 * 2

    need = (tm * tk * 1 * 2                                   # A tile (int8, 2 bufs)
            + f_bytes                                         # feats
            + (feat_dim * d_pad * 2 * 2 if apply_w else 0)    # W
            + 3 * d_pad * 4 * 2                               # b/gamma/beta
            + tm * 4 * 2                                      # dinv column
            + tm * d_pad * 4 * 2                              # out tile (f32)
            + tm * feat_dim * 4)                              # acc scratch
    vmem_limit = int(min(max(need * 3 // 2, 32 * 1024 * 1024), 48 * 1024 * 1024))

    kernel = _make_gcn_ln_kernel(dout, apply_w, resident, tk)

    in_specs = [
        pl.BlockSpec((tm, tk), lambda i, k: (i, k)),     # (A+I) int8 tile
        f_spec,                                           # X or XW (bf16)
    ]
    args = [a01, feats]
    if apply_w:
        in_specs.append(pl.BlockSpec((din_pad, d_pad), lambda i, k: (0, 0)))
        args.append(w_pad)
    in_specs += [
        pl.BlockSpec((3, d_pad), lambda i, k: (0, 0)),    # b/gamma/beta
        pl.BlockSpec((tm, 1), lambda i, k: (i, 0)),       # D^-1/2 row scale
    ]
    args += [params, dinv_pad]

    out_pad = pl.pallas_call(
        kernel,
        out_shape=jax.ShapeDtypeStruct((n_pad, d_pad), jnp.float32),
        grid_spec=pltpu.PrefetchScalarGridSpec(
            num_scalar_prefetch=0,
            grid=(n_pad // tm, n_pad // tk),
            in_specs=in_specs,
            out_specs=pl.BlockSpec((tm, d_pad), lambda i, k: (i, 0)),
            scratch_shapes=[pltpu.VMEM((tm, feat_dim), jnp.float32)],
        ),
        compiler_params=pltpu.CompilerParams(
            dimension_semantics=("parallel", "arbitrary"),
            vmem_limit_bytes=vmem_limit,
        ),
    )(*args)

    return out_pad[:n, :dout]


if __name__ == "__main__":
    key = jax.random.PRNGKey(0)
    k_x, k_w, k_e = jax.random.split(key, 3)

    N = 16     # graph nodes
    DIN = 8    # input_dim
    DOUT = 16  # output_dim
    E = 24     # directed edges (made undirected below)

    x = jax.random.normal(k_x, (N, DIN), dtype=jnp.float32)

    src = jax.random.randint(k_e, (E,), 0, N, dtype=jnp.int32)
    dst = jax.random.randint(jax.random.fold_in(k_e, 1), (E,), 0, N, dtype=jnp.int32)
    edge_index = jnp.stack(
        [jnp.concatenate([src, dst]), jnp.concatenate([dst, src])], axis=0
    )

    w = jax.random.normal(k_w, (DIN, DOUT), dtype=jnp.float32) * (1.0 / jnp.sqrt(DIN))
    b = jnp.zeros((DOUT,), dtype=jnp.float32)
    gamma = jnp.ones((DOUT,), dtype=jnp.float32)
    beta = jnp.zeros((DOUT,), dtype=jnp.float32)

    out = conv_block_v1(x, edge_index, w, b, gamma, beta)
    out = jax.block_until_ready(out)

    # Pure-JAX f32 reference (dense, no padding / bf16) for a sanity check.
    a_ref = jnp.zeros((N, N), jnp.float32).at[edge_index[1], edge_index[0]].add(1.0)
    a_ref = a_ref + jnp.eye(N, dtype=jnp.float32)
    deg_ref = jnp.sum(a_ref, axis=1)
    dinv_ref = 1.0 / jnp.sqrt(deg_ref)
    h_ref = (dinv_ref[:, None] * a_ref * dinv_ref[None, :]) @ x @ w + b
    mu = jnp.mean(h_ref, axis=-1, keepdims=True)
    var = jnp.mean((h_ref - mu) ** 2, axis=-1, keepdims=True)
    ref = (h_ref - mu) / jnp.sqrt(var + LN_EPS) * gamma + beta

    assert out.shape == (N, DOUT)
    assert bool(jnp.all(jnp.isfinite(out)))
    err = float(jnp.max(jnp.abs(out - ref)))
    assert err < 0.15, f"max abs err vs f32 reference: {err}"
    print("KERNEL_OK")
</pallas_src>

<mosaic_0001>
module attributes {stable_mosaic.version = 11 : i64} {
  func.func @kernel(%arg0: i32, %arg1: i32, %arg2: memref<128x128xi8, #tpu.memory_space<vmem>>, %arg3: memref<128x128xbf16, #tpu.memory_space<vmem>>, %arg4: memref<128x128xbf16, #tpu.memory_space<vmem>>, %arg5: memref<3x128xf32, #tpu.memory_space<vmem>>, %arg6: memref<128x1xf32, #tpu.memory_space<vmem>>, %arg7: memref<128x128xf32, #tpu.memory_space<vmem>>, %arg8: memref<128x128xf32, #tpu.memory_space<vmem>>) attributes {dimension_semantics = [#tpu.dimension_semantics<parallel>, #tpu.dimension_semantics<arbitrary>], iteration_bounds = array<i64: 1, 1>, scalar_prefetch = 0 : i64, scratch_operands = 1 : i64, tpu.core_type = #tpu.core_type<tc>, window_params = [{transform_indices = @transform_0, window_bounds = array<i64: 128, 128>}, {pipeline_mode = #tpu.pipeline_mode<synchronous>, transform_indices = @transform_1, window_bounds = array<i64: 128, 128>}, {pipeline_mode = #tpu.pipeline_mode<synchronous>, transform_indices = @transform_2, window_bounds = array<i64: 128, 128>}, {pipeline_mode = #tpu.pipeline_mode<synchronous>, transform_indices = @transform_3, window_bounds = array<i64: 3, 128>}, {transform_indices = @transform_4, window_bounds = array<i64: 128, 1>}, {transform_indices = @transform_5, window_bounds = array<i64: 128, 128>}]} {
    %c0_i32 = arith.constant 0 : i32
    %0 = arith.cmpi eq, %arg1, %c0_i32 : i32
    %1 = arith.extui %0 : i1 to i32
    %c0_i32_0 = arith.constant 0 : i32
    %2 = arith.cmpi ne, %1, %c0_i32_0 : i32
    scf.if %2 {
      %cst_9 = arith.constant 0.000000e+00 : f32
      %16 = vector.broadcast %cst_9 : f32 to vector<128x128xf32>
      %c0_10 = arith.constant 0 : index
      %c0_11 = arith.constant 0 : index
      %17 = vector.load %arg8[%c0_10, %c0_11] : memref<128x128xf32, #tpu.memory_space<vmem>>, vector<128x128xf32>
      tpu.vector_store %arg8[%c0_10, %c0_11], %16 {strides = array<i32>} : memref<128x128xf32, #tpu.memory_space<vmem>>, vector<128x128xf32>,
    } else {
    }
    %c0 = arith.constant 0 : index
    %c0_1 = arith.constant 0 : index
    %3 = vector.load %arg2[%c0, %c0_1] : memref<128x128xi8, #tpu.memory_space<vmem>>, vector<128x128xi8>
    %4 = arith.sitofp %3 : vector<128x128xi8> to vector<128x128xbf16>
    %c128_i32 = arith.constant 128 : i32
    %5 = arith.muli %arg1, %c128_i32 : i32
    %6 = tpu.assume_multiple %5, 128 : i32
    %7 = arith.index_cast %6 : i32 to index
    %c0_2 = arith.constant 0 : index
    %8 = vector.load %arg3[%7, %c0_2] : memref<128x128xbf16, #tpu.memory_space<vmem>>, vector<128x128xbf16>
    %c0_3 = arith.constant 0 : index
    %c0_4 = arith.constant 0 : index
    %9 = vector.load %arg8[%c0_3, %c0_4] : memref<128x128xf32, #tpu.memory_space<vmem>>, vector<128x128xf32>
    %cst = arith.constant dense<0.000000e+00> : vector<128x128xf32>
    %10 = tpu.matmul %4, %8, %cst {dimension_numbers = #tpu.dot_dimension_numbers<[1], [0], [0], [1], [0, 0, 1, 1], [], []>} : vector<128x128xbf16>, vector<128x128xbf16>, vector<128x128xf32> -> vector<128x128xf32>
    %11 = arith.addf %9, %10 : vector<128x128xf32>
    %c0_5 = arith.constant 0 : index
    %c0_6 = arith.constant 0 : index
    %12 = vector.load %arg8[%c0_5, %c0_6] : memref<128x128xf32, #tpu.memory_space<vmem>>, vector<128x128xf32>
    tpu.vector_store %arg8[%c0_5, %c0_6], %11 {strides = array<i32>} : memref<128x128xf32, #tpu.memory_space<vmem>>, vector<128x128xf32>,
    %c0_i32_7 = arith.constant 0 : i32
    %13 = arith.cmpi eq, %arg1, %c0_i32_7 : i32
    %14 = arith.extui %13 : i1 to i32
    %c0_i32_8 = arith.constant 0 : i32
    %15 = arith.cmpi ne, %14, %c0_i32_8 : i32
    scf.if %15 {
      %c0_9 = arith.constant 0 : index
      %c0_10 = arith.constant 0 : index
      %16 = vector.load %arg8[%c0_9, %c0_10] : memref<128x128xf32, #tpu.memory_space<vmem>>, vector<128x128xf32>
      %17 = arith.truncf %16 : vector<128x128xf32> to vector<128x128xbf16>
      %c0_11 = arith.constant 0 : index
      %c0_12 = arith.constant 0 : index
      %18 = vector.load %arg4[%c0_11, %c0_12] : memref<128x128xbf16, #tpu.memory_space<vmem>>, vector<128x128xbf16>
      %cst_13 = arith.constant dense<0.000000e+00> : vector<128x128xf32>
      %19 = tpu.matmul %17, %18, %cst_13 {dimension_numbers = #tpu.dot_dimension_numbers<[1], [0], [0], [1], [0, 0, 1, 1], [], []>} : vector<128x128xbf16>, vector<128x128xbf16>, vector<128x128xf32> -> vector<128x128xf32>
      %c0_14 = arith.constant 0 : index
      %c0_15 = arith.constant 0 : index
      %20 = vector.load %arg6[%c0_14, %c0_15] : memref<128x1xf32, #tpu.memory_space<vmem>>, vector<128x1xf32>
      %21 = vector.broadcast %20 : vector<128x1xf32> to vector<128x128xf32>
      %22 = arith.mulf %19, %21 : vector<128x128xf32>
      %c0_16 = arith.constant 0 : index
      %c0_17 = arith.constant 0 : index
      %23 = vector.load %arg5[%c0_16, %c0_17] : memref<3x128xf32, #tpu.memory_space<vmem>>, vector<1x128xf32>
      %24 = vector.broadcast %23 : vector<1x128xf32> to vector<128x128xf32>
      %25 = arith.addf %22, %24 : vector<128x128xf32>
      %c1 = arith.constant 1 : index
      %c0_18 = arith.constant 0 : index
      %26 = vector.load %arg5[%c1, %c0_18] : memref<3x128xf32, #tpu.memory_space<vmem>>, vector<1x128xf32>
      %c2 = arith.constant 2 : index
      %c0_19 = arith.constant 0 : index
      %27 = vector.load %arg5[%c2, %c0_19] : memref<3x128xf32, #tpu.memory_space<vmem>>, vector<1x128xf32>
      %28 = tpu.iota {dimensions = array<i32: 1>} : vector<1x128xi32>
      %c16_i32 = arith.constant 16 : i32
      %29 = vector.broadcast %c16_i32 : i32 to vector<1x128xi32>
      %30 = arith.cmpi slt, %28, %29 : vector<1x128xi32>
      %31 = arith.extui %30 : vector<1x128xi1> to vector<1x128xi32>
      %32 = arith.sitofp %31 : vector<1x128xi32> to vector<1x128xf32>
      %33 = vector.broadcast %32 : vector<1x128xf32> to vector<128x128xf32>
      %34 = arith.mulf %25, %33 : vector<128x128xf32>
      %cst_20 = arith.constant dense<0.000000e+00> : vector<128xf32>
      %35 = vector.multi_reduction <add>, %34, %cst_20 [1] : vector<128x128xf32> to vector<128xf32>
      %36 = vector.shape_cast %35 : vector<128xf32> to vector<128x1xf32>
      %cst_21 = arith.constant 6.250000e-02 : f32
      %37 = vector.broadcast %cst_21 : f32 to vector<128x1xf32>
      %38 = arith.mulf %36, %37 : vector<128x1xf32>
      %39 = vector.broadcast %38 : vector<128x1xf32> to vector<128x128xf32>
      %40 = arith.subf %25, %39 : vector<128x128xf32>
      %41 = vector.broadcast %32 : vector<1x128xf32> to vector<128x128xf32>
      %42 = arith.mulf %40, %41 : vector<128x128xf32>
      %43 = arith.mulf %42, %42 : vector<128x128xf32>
      %cst_22 = arith.constant dense<0.000000e+00> : vector<128xf32>
      %44 = vector.multi_reduction <add>, %43, %cst_22 [1] : vector<128x128xf32> to vector<128xf32>
      %45 = vector.shape_cast %44 : vector<128xf32> to vector<128x1xf32>
      %cst_23 = arith.constant 6.250000e-02 : f32
      %46 = vector.broadcast %cst_23 : f32 to vector<128x1xf32>
      %47 = arith.mulf %45, %46 : vector<128x1xf32>
      %cst_24 = arith.constant 9.99999974E-6 : f32
      %48 = vector.broadcast %cst_24 : f32 to vector<128x1xf32>
      %49 = arith.addf %47, %48 : vector<128x1xf32>
      %50 = math.rsqrt %49 : vector<128x1xf32>
      %51 = vector.broadcast %50 : vector<128x1xf32> to vector<128x128xf32>
      %52 = arith.mulf %42, %51 : vector<128x128xf32>
      %53 = vector.broadcast %26 : vector<1x128xf32> to vector<128x128xf32>
      %54 = arith.mulf %52, %53 : vector<128x128xf32>
      %55 = vector.broadcast %27 : vector<1x128xf32> to vector<128x128xf32>
      %56 = arith.addf %54, %55 : vector<128x128xf32>
      %c0_25 = arith.constant 0 : index
      %c0_26 = arith.constant 0 : index
      %57 = vector.load %arg7[%c0_25, %c0_26] : memref<128x128xf32, #tpu.memory_space<vmem>>, vector<128x128xf32>
      tpu.vector_store %arg7[%c0_25, %c0_26], %56 {strides = array<i32>} : memref<128x128xf32, #tpu.memory_space<vmem>>, vector<128x128xf32>,
    } else {
    }
    return
  }
  func.func @transform_0(%arg0: i32, %arg1: i32) -> (i32, i32) {
    %c0_i32 = arith.constant 0 : i32
    return %arg0, %arg1 : i32, i32
  }
  func.func @transform_1(%arg0: i32, %arg1: i32) -> (i32, i32) {
    %c0_i32 = arith.constant 0 : i32
    %c0_i32_0 = arith.constant 0 : i32
    %c0_i32_1 = arith.constant 0 : i32
    return %c0_i32, %c0_i32_0 : i32, i32
  }
  func.func @transform_2(%arg0: i32, %arg1: i32) -> (i32, i32) {
    %c0_i32 = arith.constant 0 : i32
    %c0_i32_0 = arith.constant 0 : i32
    %c0_i32_1 = arith.constant 0 : i32
    return %c0_i32, %c0_i32_0 : i32, i32
  }
  func.func @transform_3(%arg0: i32, %arg1: i32) -> (i32, i32) {
    %c0_i32 = arith.constant 0 : i32
    %c0_i32_0 = arith.constant 0 : i32
    %c0_i32_1 = arith.constant 0 : i32
    return %c0_i32, %c0_i32_0 : i32, i32
  }
  func.func @transform_4(%arg0: i32, %arg1: i32) -> (i32, i32) {
    %c0_i32 = arith.constant 0 : i32
    %c0_i32_0 = arith.constant 0 : i32
    return %arg0, %c0_i32 : i32, i32
  }
  func.func @transform_5(%arg0: i32, %arg1: i32) -> (i32, i32) {
    %c0_i32 = arith.constant 0 : i32
    %c0_i32_0 = arith.constant 0 : i32
    return %arg0, %c0_i32 : i32, i32
  }
}

</mosaic_0001>

<llo_original>
// kernel: tpu_custom_call.1
$region0: #{tpu_custom_call.1}
  #allocation0 [shape = 'u32[]', space=smem, size = 0x4, offset = 0x4, fixed_abs, tag = 'smem constant byte address 0x4 - core index']
  #allocation1 [shape = 'u32[144,128]{1,0:T(1,128)}', space=vmem, size = 0x12000, scoped, tag = 'internal scratch']
  #allocation2 [shape = 'f32[128,128]{1,0:T(8,128)}', space=vmem, size = 0x10000, scoped, tag = 'scratch operand']
  %s0 = inlined_call_operand.hbm [shape: s8[128,128], index: 0, kind: input, shape index: {}]
  %s1 = inlined_call_operand.vmem [shape: bf16[128,128], index: 1, kind: input, shape index: {}]
  %s2 = inlined_call_operand.vmem [shape: bf16[128,128], index: 2, kind: input, shape index: {}]
  %s3 = inlined_call_operand.vmem [shape: f32[3,128], index: 3, kind: input, shape index: {}]
  %s4 = inlined_call_operand.vmem [shape: f32[128,1], index: 4, kind: input, shape index: {}]
  %s5 = inlined_call_operand.hbm [shape: f32[128,128], index: 5, kind: output, shape index: {}]
  %s6 = sld [smem:[#allocation0]]
  $region42: #{tpu_custom_call.1} parent=0
    _
  %s8 = ssub.s32 1, %s6
  %s9 = scalar_select 0, %s8, %s6
  $region1: #{tpu_custom_call.1} parent=0
    #allocation3 [shape = 'u8[16384]{0}', space=vmem, size = 0x4000, scoped, tag = 'input window, operand 0, single buffered']
    #allocation4 [shape = 's32[1]{0}', space=sflag, size = 0x4, scoped, tag = 'scoped memory for tpu_custom_call.1']
    #allocation5 [shape = 's32[1]{0}', space=sflag, size = 0x4, scoped, tag = 'scoped memory for tpu_custom_call.1']
    #allocation6 [shape = 'u8[65536]{0}', space=vmem, size = 0x10000, scoped, tag = 'output window, operand 0, single buffered']
    %10 = vsyncpa [#allocation4], 0
    %11 = vsyncpa [#allocation5], 0
    // Predicated region
    $region2: #{tpu_custom_call.1} parent=1 // pred_check
      _
    $region3: #{tpu_custom_call.1} parent=1 // pred_check_branch
      %13 = sbr.rel (0) target = $region5
    $region4: #{tpu_custom_call.1} parent=1 // pred_region
      %s15 = ssub.s32 512, 512
      %16 = vsyncadd [#allocation4], %s15
      %s17 = sshll.u32 [#allocation3], 4
      %s18 = int_to_ptr.vmem [resolvable:$true] %s17
      %23 = dma.hbm_to_vmem [thread:$0]  %s0, 512, %s18, [#allocation4], 128, 128, 8
    $region5: #{tpu_custom_call.1} parent=1 // pred_fallthru
      _
    // Predicated region
    $region6: #{tpu_custom_call.1} parent=1 // pred_check
      _
    $region7: #{tpu_custom_call.1} parent=1 // pred_check_branch
      %25 = sbr.rel (0) target = $region9
    $region8: #{tpu_custom_call.1} parent=1 // pred_region
      _
    $region9: #{tpu_custom_call.1} parent=1 // pred_fallthru
      _
    // Predicated region
    $region10: #{tpu_custom_call.1} parent=1 // pred_check
      _
    $region11: #{tpu_custom_call.1} parent=1 // pred_check_branch
      %27 = sbr.rel (0) target = $region13
    $region12: #{tpu_custom_call.1} parent=1 // pred_region
      _
    $region13: #{tpu_custom_call.1} parent=1 // pred_fallthru
      _
    // Predicated region
    $region14: #{tpu_custom_call.1} parent=1 // pred_check
      _
    $region15: #{tpu_custom_call.1} parent=1 // pred_check_branch
      %29 = sbr.rel (0) target = $region17
    $region16: #{tpu_custom_call.1} parent=1 // pred_region
      _
    $region17: #{tpu_custom_call.1} parent=1 // pred_fallthru
      _
    // Predicated region
    $region18: #{tpu_custom_call.1} parent=1 // pred_check
      _
    $region19: #{tpu_custom_call.1} parent=1 // pred_check_branch
      %31 = sbr.rel (0) target = $region21
    $region20: #{tpu_custom_call.1} parent=1 // pred_region
      _
    $region21: #{tpu_custom_call.1} parent=1 // pred_fallthru
      _
    // Predicated region
    $region22: #{tpu_custom_call.1} parent=1 // pred_check
      _
    $region23: #{tpu_custom_call.1} parent=1 // pred_check_branch
      %33 = sbr.rel (0) target = $region25
    $region24: #{tpu_custom_call.1} parent=1 // pred_region
      %34 = dma.done [#allocation4], 512
    $region25: #{tpu_custom_call.1} parent=1 // pred_fallthru
      _
    %p36 = scmp.eq.s32.totalorder 0, 0
    // Predicated region
    $region26: #{tpu_custom_call.1} parent=1 // pred_check
      %p37 = pneg %p36
    $region27: #{tpu_custom_call.1} parent=1 // pred_check_branch
      %39 = sbr.rel (%p37) target = $region29
    $region28: #{tpu_custom_call.1} parent=1 // pred_region
      %40 = vst [vmem:[#allocation2] sm:$0xff] 0.0
      %41 = vst [vmem:[#allocation2 + $0x8] sm:$0xff] 0.0
      %42 = vst [vmem:[#allocation2 + $0x10] sm:$0xff] 0.0
      %43 = vst [vmem:[#allocation2 + $0x18] sm:$0xff] 0.0
      %44 = vst [vmem:[#allocation2 + $0x20] sm:$0xff] 0.0
      %45 = vst [vmem:[#allocation2 + $0x28] sm:$0xff] 0.0
      %46 = vst [vmem:[#allocation2 + $0x30] sm:$0xff] 0.0
      %47 = vst [vmem:[#allocation2 + $0x38] sm:$0xff] 0.0
      %48 = vst [vmem:[#allocation2 + $0x40] sm:$0xff] 0.0
      %49 = vst [vmem:[#allocation2 + $0x48] sm:$0xff] 0.0
      %50 = vst [vmem:[#allocation2 + $0x50] sm:$0xff] 0.0
      %51 = vst [vmem:[#allocation2 + $0x58] sm:$0xff] 0.0
      %52 = vst [vmem:[#allocation2 + $0x60] sm:$0xff] 0.0
      %53 = vst [vmem:[#allocation2 + $0x68] sm:$0xff] 0.0
      %54 = vst [vmem:[#allocation2 + $0x70] sm:$0xff] 0.0
      %55 = vst [vmem:[#allocation2 + $0x78] sm:$0xff] 0.0
    $region29: #{tpu_custom_call.1} parent=1 // pred_fallthru
      _
    %v56 = vld [vmem:[#allocation3] sm:$0xff]
    %v57 = vld [vmem:[#allocation3 + $0x8] sm:$0xff]
    %v58 = vld [vmem:[#allocation3 + $0x10] sm:$0xff]
    %v59 = vld [vmem:[#allocation3 + $0x18] sm:$0xff]
    %v60 = vunpack.c.l.s8.bf16 %v56
    %v61 = vunpack.c.h.s8.bf16 %v56
    %v62 = vunpack.c.l.s8.bf16 %v57
    %v63 = vunpack.c.h.s8.bf16 %v57
    %v64 = vunpack.c.l.s8.bf16 %v58
    %v65 = vunpack.c.h.s8.bf16 %v58
    %v66 = vunpack.c.l.s8.bf16 %v59
    %v67 = vunpack.c.h.s8.bf16 %v59
    %s68 = smul.u32 0, 128
    %s69 = sshra.s32 %s68, 3
    %s70 = sand.u32 %s68, 7
    %s71 = smul.addr %s69, 4
    %s72 = scalar_lea.vmem %s1, %s71
    %v73 = vld [vmem:[%s72] sm:$0xf]
    %v74 = vld [vmem:[%s72 + $0x4] sm:$0xf]
    %v75 = vld [vmem:[%s72 + $0x8] sm:$0xf]
    %v76 = vld [vmem:[%s72 + $0xc] sm:$0xf]
    %v77 = vld [vmem:[%s72 + $0x10] sm:$0xf]
    %v78 = vld [vmem:[%s72 + $0x14] sm:$0xf]
    %v79 = vld [vmem:[%s72 + $0x18] sm:$0xf]
    %v80 = vld [vmem:[%s72 + $0x1c] sm:$0xf]
    %v81 = vld [vmem:[%s72 + $0x20] sm:$0xf]
    %v82 = vld [vmem:[%s72 + $0x24] sm:$0xf]
    %v83 = vld [vmem:[%s72 + $0x28] sm:$0xf]
    %v84 = vld [vmem:[%s72 + $0x2c] sm:$0xf]
    %v85 = vld [vmem:[%s72 + $0x30] sm:$0xf]
    %v86 = vld [vmem:[%s72 + $0x34] sm:$0xf]
    %v87 = vld [vmem:[%s72 + $0x38] sm:$0xf]
    %v88 = vld [vmem:[%s72 + $0x3c] sm:$0xf]
    %v89 = vld [vmem:[#allocation2] sm:$0xff]
    %v90 = vld [vmem:[#allocation2 + $0x8] sm:$0xff]
    %v91 = vld [vmem:[#allocation2 + $0x10] sm:$0xff]
    %v92 = vld [vmem:[#allocation2 + $0x18] sm:$0xff]
    %v93 = vld [vmem:[#allocation2 + $0x20] sm:$0xff]
    %v94 = vld [vmem:[#allocation2 + $0x28] sm:$0xff]
    %v95 = vld [vmem:[#allocation2 + $0x30] sm:$0xff]
    %v96 = vld [vmem:[#allocation2 + $0x38] sm:$0xff]
    %v97 = vld [vmem:[#allocation2 + $0x40] sm:$0xff]
    %v98 = vld [vmem:[#allocation2 + $0x48] sm:$0xff]
    %v99 = vld [vmem:[#allocation2 + $0x50] sm:$0xff]
    %v100 = vld [vmem:[#allocation2 + $0x58] sm:$0xff]
    %v101 = vld [vmem:[#allocation2 + $0x60] sm:$0xff]
    %v102 = vld [vmem:[#allocation2 + $0x68] sm:$0xff]
    %v103 = vld [vmem:[#allocation2 + $0x70] sm:$0xff]
    %v104 = vld [vmem:[#allocation2 + $0x78] sm:$0xff]
    %v121 = vunpack.c.l.b16 %v73
    %v122 = vunpack.c.l.b16 %v74
    %v123 = vunpack.c.l.b16 %v75
    %v124 = vunpack.c.l.b16 %v76
    %v125 = vunpack.c.l.b16 %v77
    %v126 = vunpack.c.l.b16 %v78
    %v127 = vunpack.c.l.b16 %v79
    %v128 = vunpack.c.l.b16 %v80
    %v129 = vunpack.c.l.b16 %v81
    %v130 = vunpack.c.l.b16 %v82
    %v131 = vunpack.c.l.b16 %v83
    %v132 = vunpack.c.l.b16 %v84
    %v133 = vunpack.c.l.b16 %v85
    %v134 = vunpack.c.l.b16 %v86
    %v135 = vunpack.c.l.b16 %v87
    %v136 = vunpack.c.l.b16 %v88
    %v137 = vpack.c.b16 %v122, %v121
    %v138 = vpack.c.b16 %v124, %v123
    %v139 = vpack.c.b16 %v126, %v125
    %v140 = vpack.c.b16 %v128, %v127
    %v141 = vpack.c.b16 %v130, %v129
    %v142 = vpack.c.b16 %v132, %v131
    %v143 = vpack.c.b16 %v134, %v133
    %v144 = vpack.c.b16 %v136, %v135
    %153 = vmatprep.subr.bf16.mxu0 0
    %154 = vmatpush1.bf16.msra.mxu0 %v144
    %155 = vmatprep.subr.bf16.mxu0 0
    %156 = vmatpush1.bf16.msra.mxu0 %v143
    %157 = vmatprep.subr.bf16.mxu0 0
    %158 = vmatpush1.bf16.msra.mxu0 %v142
    %159 = vmatprep.subr.bf16.mxu0 0
    %160 = vmatpush1.bf16.msra.mxu0 %v141
    %161 = vmatprep.subr.bf16.mxu0 0
    %162 = vmatpush1.bf16.msra.mxu0 %v140
    %163 = vmatprep.subr.bf16.mxu0 0
    %164 = vmatpush1.bf16.msra.mxu0 %v139
    %165 = vmatprep.subr.bf16.mxu0 0
    %166 = vmatpush1.bf16.msra.mxu0 %v138
    %167 = vmatprep.subr.bf16.mxu0 0
    %168 = vmatpush1.bf16.msra.mxu0 %v137
    %169 = vmatprep.subr.bf16.mxu0 0
    %170 = vmatpush2.bf16.msra.mxu0 0
    %171 = vmatprep.subr.bf16.mxu0 0
    %172 = vmatpush2.bf16.msra.mxu0 0
    %173 = vmatprep.subr.bf16.mxu0 0
    %174 = vmatpush2.bf16.msra.mxu0 0
    %175 = vmatprep.subr.bf16.mxu0 0
    %176 = vmatpush2.bf16.msra.mxu0 0
    %177 = vmatprep.subr.bf16.mxu0 0
    %178 = vmatpush2.bf16.msra.mxu0 0
    %179 = vmatprep.subr.bf16.mxu0 0
    %180 = vmatpush2.bf16.msra.mxu0 0
    %181 = vmatprep.subr.bf16.mxu0 0
    %182 = vmatpush2.bf16.msra.mxu0 0
    %183 = vmatprep.subr.bf16.mxu0 0
    %184 = vmatpush2.bf16.msra.mxu0 0
    %185 = vmatprep.mubr.bf16.mxu0 0
    %186 = vmatmul.mubr.bf16.gmra.mxu0 %v60
    %v187 = vpop.f32.mrf.mxu0
    %v188 = vadd.f32 0.0, %v187
    %v189 = vpop.f32.mrf.mxu0
    %v190 = vpop.f32.mrf.mxu0
    %v191 = vadd.f32 0.0, %v190
    %v192 = vpop.f32.mrf.mxu0
    %193 = vmatprep.mubr.bf16.mxu0 0
    %194 = vmatmul.mubr.bf16.gmra.mxu0 %v61
    %v195 = vpop.f32.mrf.mxu0
    %v196 = vadd.f32 0.0, %v195
    %v197 = vpop.f32.mrf.mxu0
    %v198 = vpop.f32.mrf.mxu0
    %v199 = vadd.f32 0.0, %v198
    %v200 = vpop.f32.mrf.mxu0
    %201 = vmatprep.mubr.bf16.mxu0 0
    %202 = vmatmul.mubr.bf16.gmra.mxu0 %v62
    %v203 = vpop.f32.mrf.mxu0
    %v204 = vadd.f32 0.0, %v203
    %v205 = vpop.f32.mrf.mxu0
    %v206 = vpop.f32.mrf.mxu0
    %v207 = vadd.f32 0.0, %v206
    %v208 = vpop.f32.mrf.mxu0
    %209 = vmatprep.mubr.bf16.mxu0 0
    %210 = vmatmul.mubr.bf16.gmra.mxu0 %v63
    %v211 = vpop.f32.mrf.mxu0
    %v212 = vadd.f32 0.0, %v211
    %v213 = vpop.f32.mrf.mxu0
    %v214 = vpop.f32.mrf.mxu0
    %v215 = vadd.f32 0.0, %v214
    %v216 = vpop.f32.mrf.mxu0
    %217 = vmatprep.mubr.bf16.mxu0 0
    %218 = vmatmul.mubr.bf16.gmra.mxu0 %v64
    %v219 = vpop.f32.mrf.mxu0
    %v220 = vadd.f32 0.0, %v219
    %v221 = vpop.f32.mrf.mxu0
    %v222 = vpop.f32.mrf.mxu0
    %v223 = vadd.f32 0.0, %v222
    %v224 = vpop.f32.mrf.mxu0
    %225 = vmatprep.mubr.bf16.mxu0 0
    %226 = vmatmul.mubr.bf16.gmra.mxu0 %v65
    %v227 = vpop.f32.mrf.mxu0
    %v228 = vadd.f32 0.0, %v227
    %v229 = vpop.f32.mrf.mxu0
    %v230 = vpop.f32.mrf.mxu0
    %v231 = vadd.f32 0.0, %v230
    %v232 = vpop.f32.mrf.mxu0
    %233 = vmatprep.mubr.bf16.mxu0 0
    %234 = vmatmul.mubr.bf16.gmra.mxu0 %v66
    %v235 = vpop.f32.mrf.mxu0
    %v236 = vadd.f32 0.0, %v235
    %v237 = vpop.f32.mrf.mxu0
    %v238 = vpop.f32.mrf.mxu0
    %v239 = vadd.f32 0.0, %v238
    %v240 = vpop.f32.mrf.mxu0
    %241 = vmatprep.mubr.bf16.mxu0 0
    %242 = vmatmul.mubr.bf16.gmra.mxu0 %v67
    %v243 = vpop.f32.mrf.mxu0
    %v244 = vadd.f32 0.0, %v243
    %v245 = vpop.f32.mrf.mxu0
    %v246 = vpop.f32.mrf.mxu0
    %v247 = vadd.f32 0.0, %v246
    %v248 = vpop.f32.mrf.mxu0
    %249 = vdwg.mxu0
    %v250 = vadd.f32 %v89, %v188
    %v251 = vadd.f32 %v90, %v191
    %v252 = vadd.f32 %v91, %v196
    %v253 = vadd.f32 %v92, %v199
    %v254 = vadd.f32 %v93, %v204
    %v255 = vadd.f32 %v94, %v207
    %v256 = vadd.f32 %v95, %v212
    %v257 = vadd.f32 %v96, %v215
    %v258 = vadd.f32 %v97, %v220
    %v259 = vadd.f32 %v98, %v223
    %v260 = vadd.f32 %v99, %v228
    %v261 = vadd.f32 %v100, %v231
    %v262 = vadd.f32 %v101, %v236
    %v263 = vadd.f32 %v102, %v239
    %v264 = vadd.f32 %v103, %v244
    %v265 = vadd.f32 %v104, %v247
    %266 = vst [vmem:[#allocation2] sm:$0xff] %v250
    %267 = vst [vmem:[#allocation2 + $0x8] sm:$0xff] %v251
    %268 = vst [vmem:[#allocation2 + $0x10] sm:$0xff] %v252
    %269 = vst [vmem:[#allocation2 + $0x18] sm:$0xff] %v253
    %270 = vst [vmem:[#allocation2 + $0x20] sm:$0xff] %v254
    %271 = vst [vmem:[#allocation2 + $0x28] sm:$0xff] %v255
    %272 = vst [vmem:[#allocation2 + $0x30] sm:$0xff] %v256
    %273 = vst [vmem:[#allocation2 + $0x38] sm:$0xff] %v257
    %274 = vst [vmem:[#allocation2 + $0x40] sm:$0xff] %v258
    %275 = vst [vmem:[#allocation2 + $0x48] sm:$0xff] %v259
    %276 = vst [vmem:[#allocation2 + $0x50] sm:$0xff] %v260
    %277 = vst [vmem:[#allocation2 + $0x58] sm:$0xff] %v261
    %278 = vst [vmem:[#allocation2 + $0x60] sm:$0xff] %v262
    %279 = vst [vmem:[#allocation2 + $0x68] sm:$0xff] %v263
    %280 = vst [vmem:[#allocation2 + $0x70] sm:$0xff] %v264
    %281 = vst [vmem:[#allocation2 + $0x78] sm:$0xff] %v265
    // Predicated region
    $region30: #{tpu_custom_call.1} parent=1 // pred_check
      %p282 = pneg %p36
    $region31: #{tpu_custom_call.1} parent=1 // pred_check_branch
      %284 = sbr.rel (%p282) target = $region33
    $region32: #{tpu_custom_call.1} parent=1 // pred_region
      %v285 = vld [vmem:[#allocation2] sm:$0xff]
      %v286 = vld [vmem:[#allocation2 + $0x8] sm:$0xff]
      %v287 = vld [vmem:[#allocation2 + $0x10] sm:$0xff]
      %v288 = vld [vmem:[#allocation2 + $0x18] sm:$0xff]
      %v289 = vld [vmem:[#allocation2 + $0x20] sm:$0xff]
      %v290 = vld [vmem:[#allocation2 + $0x28] sm:$0xff]
      %v291 = vld [vmem:[#allocation2 + $0x30] sm:$0xff]
      %v292 = vld [vmem:[#allocation2 + $0x38] sm:$0xff]
      %v293 = vld [vmem:[#allocation2 + $0x40] sm:$0xff]
      %v294 = vld [vmem:[#allocation2 + $0x48] sm:$0xff]
      %v295 = vld [vmem:[#allocation2 + $0x50] sm:$0xff]
      %v296 = vld [vmem:[#allocation2 + $0x58] sm:$0xff]
      %v297 = vld [vmem:[#allocation2 + $0x60] sm:$0xff]
      %v298 = vld [vmem:[#allocation2 + $0x68] sm:$0xff]
      %v299 = vld [vmem:[#allocation2 + $0x70] sm:$0xff]
      %v300 = vld [vmem:[#allocation2 + $0x78] sm:$0xff]
      %v301 = vpack.c.bf16 %v286, %v285
      %v302 = vpack.c.bf16 %v288, %v287
      %v303 = vpack.c.bf16 %v290, %v289
      %v304 = vpack.c.bf16 %v292, %v291
      %v305 = vpack.c.bf16 %v294, %v293
      %v306 = vpack.c.bf16 %v296, %v295
      %v307 = vpack.c.bf16 %v298, %v297
      %v308 = vpack.c.bf16 %v300, %v299
      %v309 = vld [vmem:[%s2] sm:$0xf]
      %v310 = vld [vmem:[%s2 + $0x4] sm:$0xf]
      %v311 = vld [vmem:[%s2 + $0x8] sm:$0xf]
      %v312 = vld [vmem:[%s2 + $0xc] sm:$0xf]
      %v313 = vld [vmem:[%s2 + $0x10] sm:$0xf]
      %v314 = vld [vmem:[%s2 + $0x14] sm:$0xf]
      %v315 = vld [vmem:[%s2 + $0x18] sm:$0xf]
      %v316 = vld [vmem:[%s2 + $0x1c] sm:$0xf]
      %v317 = vld [vmem:[%s2 + $0x20] sm:$0xf]
      %v318 = vld [vmem:[%s2 + $0x24] sm:$0xf]
      %v319 = vld [vmem:[%s2 + $0x28] sm:$0xf]
      %v320 = vld [vmem:[%s2 + $0x2c] sm:$0xf]
      %v321 = vld [vmem:[%s2 + $0x30] sm:$0xf]
      %v322 = vld [vmem:[%s2 + $0x34] sm:$0xf]
      %v323 = vld [vmem:[%s2 + $0x38] sm:$0xf]
      %v324 = vld [vmem:[%s2 + $0x3c] sm:$0xf]
      %v341 = vunpack.c.l.b16 %v309
      %v342 = vunpack.c.l.b16 %v310
      %v343 = vunpack.c.l.b16 %v311
      %v344 = vunpack.c.l.b16 %v312
      %v345 = vunpack.c.l.b16 %v313
      %v346 = vunpack.c.l.b16 %v314
      %v347 = vunpack.c.l.b16 %v315
      %v348 = vunpack.c.l.b16 %v316
      %v349 = vunpack.c.l.b16 %v317
      %v350 = vunpack.c.l.b16 %v318
      %v351 = vunpack.c.l.b16 %v319
      %v352 = vunpack.c.l.b16 %v320
      %v353 = vunpack.c.l.b16 %v321
      %v354 = vunpack.c.l.b16 %v322
      %v355 = vunpack.c.l.b16 %v323
      %v356 = vunpack.c.l.b16 %v324
      %v357 = vpack.c.b16 %v342, %v341
      %v358 = vpack.c.b16 %v344, %v343
      %v359 = vpack.c.b16 %v346, %v345
      %v360 = vpack.c.b16 %v348, %v347
      %v361 = vpack.c.b16 %v350, %v349
      %v362 = vpack.c.b16 %v352, %v351
      %v363 = vpack.c.b16 %v354, %v353
      %v364 = vpack.c.b16 %v356, %v355
      %373 = vmatprep.subr.bf16.mxu0 0
      %374 = vmatpush1.bf16.msra.mxu0 %v364
      %375 = vmatprep.subr.bf16.mxu0 0
      %376 = vmatpush1.bf16.msra.mxu0 %v363
      %377 = vmatprep.subr.bf16.mxu0 0
      %378 = vmatpush1.bf16.msra.mxu0 %v362
      %379 = vmatprep.subr.bf16.mxu0 0
      %380 = vmatpush1.bf16.msra.mxu0 %v361
      %381 = vmatprep.subr.bf16.mxu0 0
      %382 = vmatpush1.bf16.msra.mxu0 %v360
      %383 = vmatprep.subr.bf16.mxu0 0
      %384 = vmatpush1.bf16.msra.mxu0 %v359
      %385 = vmatprep.subr.bf16.mxu0 0
      %386 = vmatpush1.bf16.msra.mxu0 %v358
      %387 = vmatprep.subr.bf16.mxu0 0
      %388 = vmatpush1.bf16.msra.mxu0 %v357
      %389 = vmatprep.subr.bf16.mxu0 0
      %390 = vmatpush2.bf16.msra.mxu0 0
      %391 = vmatprep.subr.bf16.mxu0 0
      %392 = vmatpush2.bf16.msra.mxu0 0
      %393 = vmatprep.subr.bf16.mxu0 0
      %394 = vmatpush2.bf16.msra.mxu0 0
      %395 = vmatprep.subr.bf16.mxu0 0
      %396 = vmatpush2.bf16.msra.mxu0 0
      %397 = vmatprep.subr.bf16.mxu0 0
      %398 = vmatpush2.bf16.msra.mxu0 0
      %399 = vmatprep.subr.bf16.mxu0 0
      %400 = vmatpush2.bf16.msra.mxu0 0
      %401 = vmatprep.subr.bf16.mxu0 0
      %402 = vmatpush2.bf16.msra.mxu0 0
      %403 = vmatprep.subr.bf16.mxu0 0
      %404 = vmatpush2.bf16.msra.mxu0 0
      %405 = vmatprep.mubr.bf16.mxu0 0
      %406 = vmatmul.mubr.bf16.gmra.mxu0 %v301
      %v407 = vpop.f32.mrf.mxu0
      %v408 = vadd.f32 0.0, %v407
      %v409 = vpop.f32.mrf.mxu0
      %v410 = vpop.f32.mrf.mxu0
      %v411 = vadd.f32 0.0, %v410
      %v412 = vpop.f32.mrf.mxu0
      %413 = vmatprep.mubr.bf16.mxu0 0
      %414 = vmatmul.mubr.bf16.gmra.mxu0 %v302
      %v415 = vpop.f32.mrf.mxu0
      %v416 = vadd.f32 0.0, %v415
      %v417 = vpop.f32.mrf.mxu0
      %v418 = vpop.f32.mrf.mxu0
      %v419 = vadd.f32 0.0, %v418
      %v420 = vpop.f32.mrf.mxu0
      %421 = vmatprep.mubr.bf16.mxu0 0
      %422 = vmatmul.mubr.bf16.gmra.mxu0 %v303
      %v423 = vpop.f32.mrf.mxu0
      %v424 = vadd.f32 0.0, %v423
      %v425 = vpop.f32.mrf.mxu0
      %v426 = vpop.f32.mrf.mxu0
      %v427 = vadd.f32 0.0, %v426
      %v428 = vpop.f32.mrf.mxu0
      %429 = vmatprep.mubr.bf16.mxu0 0
      %430 = vmatmul.mubr.bf16.gmra.mxu0 %v304
      %v431 = vpop.f32.mrf.mxu0
      %v432 = vadd.f32 0.0, %v431
      %v433 = vpop.f32.mrf.mxu0
      %v434 = vpop.f32.mrf.mxu0
      %v435 = vadd.f32 0.0, %v434
      %v436 = vpop.f32.mrf.mxu0
      %437 = vmatprep.mubr.bf16.mxu0 0
      %438 = vmatmul.mubr.bf16.gmra.mxu0 %v305
      %v439 = vpop.f32.mrf.mxu0
      %v440 = vadd.f32 0.0, %v439
      %v441 = vpop.f32.mrf.mxu0
      %v442 = vpop.f32.mrf.mxu0
      %v443 = vadd.f32 0.0, %v442
      %v444 = vpop.f32.mrf.mxu0
      %445 = vmatprep.mubr.bf16.mxu0 0
      %446 = vmatmul.mubr.bf16.gmra.mxu0 %v306
      %v447 = vpop.f32.mrf.mxu0
      %v448 = vadd.f32 0.0, %v447
      %v449 = vpop.f32.mrf.mxu0
      %v450 = vpop.f32.mrf.mxu0
      %v451 = vadd.f32 0.0, %v450
      %v452 = vpop.f32.mrf.mxu0
      %453 = vmatprep.mubr.bf16.mxu0 0
      %454 = vmatmul.mubr.bf16.gmra.mxu0 %v307
      %v455 = vpop.f32.mrf.mxu0
      %v456 = vadd.f32 0.0, %v455
      %v457 = vpop.f32.mrf.mxu0
      %v458 = vpop.f32.mrf.mxu0
      %v459 = vadd.f32 0.0, %v458
      %v460 = vpop.f32.mrf.mxu0
      %461 = vmatprep.mubr.bf16.mxu0 0
      %462 = vmatmul.mubr.bf16.gmra.mxu0 %v308
      %v463 = vpop.f32.mrf.mxu0
      %v464 = vadd.f32 0.0, %v463
      %v465 = vpop.f32.mrf.mxu0
      %v466 = vpop.f32.mrf.mxu0
      %v467 = vadd.f32 0.0, %v466
      %v468 = vpop.f32.mrf.mxu0
      %469 = vdwg.mxu0
      %v470 = vld [vmem:[%s4] sm:$0xff]
      %v471 = vld [vmem:[%s4 + $0x8] sm:$0xff]
      %v472 = vld [vmem:[%s4 + $0x10] sm:$0xff]
      %v473 = vld [vmem:[%s4 + $0x18] sm:$0xff]
      %v474 = vld [vmem:[%s4 + $0x20] sm:$0xff]
      %v475 = vld [vmem:[%s4 + $0x28] sm:$0xff]
      %v476 = vld [vmem:[%s4 + $0x30] sm:$0xff]
      %v477 = vld [vmem:[%s4 + $0x38] sm:$0xff]
      %v478 = vld [vmem:[%s4 + $0x40] sm:$0xff]
      %v479 = vld [vmem:[%s4 + $0x48] sm:$0xff]
      %v480 = vld [vmem:[%s4 + $0x50] sm:$0xff]
      %v481 = vld [vmem:[%s4 + $0x58] sm:$0xff]
      %v482 = vld [vmem:[%s4 + $0x60] sm:$0xff]
      %v483 = vld [vmem:[%s4 + $0x68] sm:$0xff]
      %v484 = vld [vmem:[%s4 + $0x70] sm:$0xff]
      %v485 = vld [vmem:[%s4 + $0x78] sm:$0xff]
      %487 = vset.pattern.permute.xlu0 0
      %488 = vperm.xlu0 %487, %v470
      %v489 = vpop.permute.xlu0 %488
      %492 = vset.pattern.permute.xlu0 0
      %493 = vperm.xlu0 %492, %v471
      %v494 = vpop.permute.xlu0 %493
      %497 = vset.pattern.permute.xlu0 0
      %498 = vperm.xlu0 %497, %v472
      %v499 = vpop.permute.xlu0 %498
      %502 = vset.pattern.permute.xlu0 0
      %503 = vperm.xlu0 %502, %v473
      %v504 = vpop.permute.xlu0 %503
      %507 = vset.pattern.permute.xlu0 0
      %508 = vperm.xlu0 %507, %v474
      %v509 = vpop.permute.xlu0 %508
      %512 = vset.pattern.permute.xlu0 0
      %513 = vperm.xlu0 %512, %v475
      %v514 = vpop.permute.xlu0 %513
      %517 = vset.pattern.permute.xlu0 0
      %518 = vperm.xlu0 %517, %v476
      %v519 = vpop.permute.xlu0 %518
      %522 = vset.pattern.permute.xlu0 0
      %523 = vperm.xlu0 %522, %v477
      %v524 = vpop.permute.xlu0 %523
      %527 = vset.pattern.permute.xlu0 0
      %528 = vperm.xlu0 %527, %v478
      %v529 = vpop.permute.xlu0 %528
      %532 = vset.pattern.permute.xlu0 0
      %533 = vperm.xlu0 %532, %v479
      %v534 = vpop.permute.xlu0 %533
      %537 = vset.pattern.permute.xlu0 0
      %538 = vperm.xlu0 %537, %v480
      %v539 = vpop.permute.xlu0 %538
      %542 = vset.pattern.permute.xlu0 0
      %543 = vperm.xlu0 %542, %v481
      %v544 = vpop.permute.xlu0 %543
      %547 = vset.pattern.permute.xlu0 0
      %548 = vperm.xlu0 %547, %v482
      %v549 = vpop.permute.xlu0 %548
      %552 = vset.pattern.permute.xlu0 0
      %553 = vperm.xlu0 %552, %v483
      %v554 = vpop.permute.xlu0 %553
      %557 = vset.pattern.permute.xlu0 0
      %558 = vperm.xlu0 %557, %v484
      %v559 = vpop.permute.xlu0 %558
      %562 = vset.pattern.permute.xlu0 0
      %563 = vperm.xlu0 %562, %v485
      %v564 = vpop.permute.xlu0 %563
      %v566 = vmul.f32 %v408, %v489
      %v567 = vmul.f32 %v411, %v494
      %v568 = vmul.f32 %v416, %v499
      %v569 = vmul.f32 %v419, %v504
      %v570 = vmul.f32 %v424, %v509
      %v571 = vmul.f32 %v427, %v514
      %v572 = vmul.f32 %v432, %v519
      %v573 = vmul.f32 %v435, %v524
      %v574 = vmul.f32 %v440, %v529
      %v575 = vmul.f32 %v443, %v534
      %v576 = vmul.f32 %v448, %v539
      %v577 = vmul.f32 %v451, %v544
      %v578 = vmul.f32 %v456, %v549
      %v579 = vmul.f32 %v459, %v554
      %v580 = vmul.f32 %v464, %v559
      %v581 = vmul.f32 %v467, %v564
      %v582 = vld [vmem:[%s3] sm:$0x1]
      %v583 = vlaneseq
      %v584 = vshrl.u32 %v583, 7
      %v585 = vsub.s32 0, %v584
      %v586 = vrot.slane %v582, %v585
      %v587 = vadd.f32 %v566, %v586
      %v588 = vadd.f32 %v567, %v586
      %v589 = vadd.f32 %v568, %v586
      %v590 = vadd.f32 %v569, %v586
      %v591 = vadd.f32 %v570, %v586
      %v592 = vadd.f32 %v571, %v586
      %v593 = vadd.f32 %v572, %v586
      %v594 = vadd.f32 %v573, %v586
      %v595 = vadd.f32 %v574, %v586
      %v596 = vadd.f32 %v575, %v586
      %v597 = vadd.f32 %v576, %v586
      %v598 = vadd.f32 %v577, %v586
      %v599 = vadd.f32 %v578, %v586
      %v600 = vadd.f32 %v579, %v586
      %v601 = vadd.f32 %v580, %v586
      %v602 = vadd.f32 %v581, %v586
      %v603 = vld [vmem:[%s3 + $0x1] sm:$0x1]
      %v604 = vld [vmem:[%s3 + $0x2] sm:$0x1]
      %v605 = vlaneseq
      %v606 = vand.u32 %v605, 127
      %vm607 = vcmp.lt.s32.totalorder %v606, 16
      %v608 = vsel %vm607, 1, 0
      %v609 = vcvt.s32.f32 %v608
      %v610 = vmul.f32 %v587, %v609
      %v611 = vmul.f32 %v588, %v609
      %v612 = vmul.f32 %v589, %v609
      %v613 = vmul.f32 %v590, %v609
      %v614 = vmul.f32 %v591, %v609
      %v615 = vmul.f32 %v592, %v609
      %v616 = vmul.f32 %v593, %v609
      %v617 = vmul.f32 %v594, %v609
      %v618 = vmul.f32 %v595, %v609
      %v619 = vmul.f32 %v596, %v609
      %v620 = vmul.f32 %v597, %v609
      %v621 = vmul.f32 %v598, %v609
      %v622 = vmul.f32 %v599, %v609
      %v623 = vmul.f32 %v600, %v609
      %v624 = vmul.f32 %v601, %v609
      %v625 = vmul.f32 %v602, %v609
      %626 = vadd.xlane.f32.xlu0 %v610
      %v627 = vpop.xlane.xlu0 %626
      %628 = vadd.xlane.f32.xlu0 %v611
      %v629 = vpop.xlane.xlu0 %628
      %630 = vadd.xlane.f32.xlu0 %v612
      %v631 = vpop.xlane.xlu0 %630
      %632 = vadd.xlane.f32.xlu0 %v613
      %v633 = vpop.xlane.xlu0 %632
      %634 = vadd.xlane.f32.xlu0 %v614
      %v635 = vpop.xlane.xlu0 %634
      %636 = vadd.xlane.f32.xlu0 %v615
      %v637 = vpop.xlane.xlu0 %636
      %638 = vadd.xlane.f32.xlu0 %v616
      %v639 = vpop.xlane.xlu0 %638
      %640 = vadd.xlane.f32.xlu0 %v617
      %v641 = vpop.xlane.xlu0 %640
      %642 = vadd.xlane.f32.xlu0 %v618
      %v643 = vpop.xlane.xlu0 %642
      %644 = vadd.xlane.f32.xlu0 %v619
      %v645 = vpop.xlane.xlu0 %644
      %646 = vadd.xlane.f32.xlu0 %v620
      %v647 = vpop.xlane.xlu0 %646
      %648 = vadd.xlane.f32.xlu0 %v621
      %v649 = vpop.xlane.xlu0 %648
      %650 = vadd.xlane.f32.xlu0 %v622
      %v651 = vpop.xlane.xlu0 %650
      %652 = vadd.xlane.f32.xlu0 %v623
      %v653 = vpop.xlane.xlu0 %652
      %654 = vadd.xlane.f32.xlu0 %v624
      %v655 = vpop.xlane.xlu0 %654
      %656 = vadd.xlane.f32.xlu0 %v625
      %v657 = vpop.xlane.xlu0 %656
      %v658 = vmul.f32 %v627, 0.0625
      %v659 = vmul.f32 %v629, 0.0625
      %v660 = vmul.f32 %v631, 0.0625
      %v661 = vmul.f32 %v633, 0.0625
      %v662 = vmul.f32 %v635, 0.0625
      %v663 = vmul.f32 %v637, 0.0625
      %v664 = vmul.f32 %v639, 0.0625
      %v665 = vmul.f32 %v641, 0.0625
      %v666 = vmul.f32 %v643, 0.0625
      %v667 = vmul.f32 %v645, 0.0625
      %v668 = vmul.f32 %v647, 0.0625
      %v669 = vmul.f32 %v649, 0.0625
      %v670 = vmul.f32 %v651, 0.0625
      %v671 = vmul.f32 %v653, 0.0625
      %v672 = vmul.f32 %v655, 0.0625
      %v673 = vmul.f32 %v657, 0.0625
      %v674 = vsub.f32 %v587, %v658
      %v675 = vsub.f32 %v588, %v659
      %v676 = vsub.f32 %v589, %v660
      %v677 = vsub.f32 %v590, %v661
      %v678 = vsub.f32 %v591, %v662
      %v679 = vsub.f32 %v592, %v663
      %v680 = vsub.f32 %v593, %v664
      %v681 = vsub.f32 %v594, %v665
      %v682 = vsub.f32 %v595, %v666
      %v683 = vsub.f32 %v596, %v667
      %v684 = vsub.f32 %v597, %v668
      %v685 = vsub.f32 %v598, %v669
      %v686 = vsub.f32 %v599, %v670
      %v687 = vsub.f32 %v600, %v671
      %v688 = vsub.f32 %v601, %v672
      %v689 = vsub.f32 %v602, %v673
      %v690 = vmul.f32 %v674, %v609
      %v691 = vmul.f32 %v675, %v609
      %v692 = vmul.f32 %v676, %v609
      %v693 = vmul.f32 %v677, %v609
      %v694 = vmul.f32 %v678, %v609
      %v695 = vmul.f32 %v679, %v609
      %v696 = vmul.f32 %v680, %v609
      %v697 = vmul.f32 %v681, %v609
      %v698 = vmul.f32 %v682, %v609
      %v699 = vmul.f32 %v683, %v609
      %v700 = vmul.f32 %v684, %v609
      %v701 = vmul.f32 %v685, %v609
      %v702 = vmul.f32 %v686, %v609
      %v703 = vmul.f32 %v687, %v609
      %v704 = vmul.f32 %v688, %v609
      %v705 = vmul.f32 %v689, %v609
      %v706 = vmul.f32 %v690, %v690
      %v707 = vmul.f32 %v691, %v691
      %v708 = vmul.f32 %v692, %v692
      %v709 = vmul.f32 %v693, %v693
      %v710 = vmul.f32 %v694, %v694
      %v711 = vmul.f32 %v695, %v695
      %v712 = vmul.f32 %v696, %v696
      %v713 = vmul.f32 %v697, %v697
      %v714 = vmul.f32 %v698, %v698
      %v715 = vmul.f32 %v699, %v699
      %v716 = vmul.f32 %v700, %v700
      %v717 = vmul.f32 %v701, %v701
      %v718 = vmul.f32 %v702, %v702
      %v719 = vmul.f32 %v703, %v703
      %v720 = vmul.f32 %v704, %v704
      %v721 = vmul.f32 %v705, %v705
      %722 = vadd.xlane.f32.xlu0 %v706
      %v723 = vpop.xlane.xlu0 %722
      %724 = vadd.xlane.f32.xlu0 %v707
      %v725 = vpop.xlane.xlu0 %724
      %726 = vadd.xlane.f32.xlu0 %v708
      %v727 = vpop.xlane.xlu0 %726
      %728 = vadd.xlane.f32.xlu0 %v709
      %v729 = vpop.xlane.xlu0 %728
      %730 = vadd.xlane.f32.xlu0 %v710
      %v731 = vpop.xlane.xlu0 %730
      %732 = vadd.xlane.f32.xlu0 %v711
      %v733 = vpop.xlane.xlu0 %732
      %734 = vadd.xlane.f32.xlu0 %v712
      %v735 = vpop.xlane.xlu0 %734
      %736 = vadd.xlane.f32.xlu0 %v713
      %v737 = vpop.xlane.xlu0 %736
      %738 = vadd.xlane.f32.xlu0 %v714
      %v739 = vpop.xlane.xlu0 %738
      %740 = vadd.xlane.f32.xlu0 %v715
      %v741 = vpop.xlane.xlu0 %740
      %742 = vadd.xlane.f32.xlu0 %v716
      %v743 = vpop.xlane.xlu0 %742
      %744 = vadd.xlane.f32.xlu0 %v717
      %v745 = vpop.xlane.xlu0 %744
      %746 = vadd.xlane.f32.xlu0 %v718
      %v747 = vpop.xlane.xlu0 %746
      %748 = vadd.xlane.f32.xlu0 %v719
      %v749 = vpop.xlane.xlu0 %748
      %750 = vadd.xlane.f32.xlu0 %v720
      %v751 = vpop.xlane.xlu0 %750
      %752 = vadd.xlane.f32.xlu0 %v721
      %v753 = vpop.xlane.xlu0 %752
      %v754 = vmul.f32 %v723, 0.0625
      %v755 = vmul.f32 %v725, 0.0625
      %v756 = vmul.f32 %v727, 0.0625
      %v757 = vmul.f32 %v729, 0.0625
      %v758 = vmul.f32 %v731, 0.0625
      %v759 = vmul.f32 %v733, 0.0625
      %v760 = vmul.f32 %v735, 0.0625
      %v761 = vmul.f32 %v737, 0.0625
      %v762 = vmul.f32 %v739, 0.0625
      %v763 = vmul.f32 %v741, 0.0625
      %v764 = vmul.f32 %v743, 0.0625
      %v765 = vmul.f32 %v745, 0.0625
      %v766 = vmul.f32 %v747, 0.0625
      %v767 = vmul.f32 %v749, 0.0625
      %v768 = vmul.f32 %v751, 0.0625
      %v769 = vmul.f32 %v753, 0.0625
      %v770 = vadd.f32 %v754, 1e-05
      %v771 = vadd.f32 %v755, 1e-05
      %v772 = vadd.f32 %v756, 1e-05
      %v773 = vadd.f32 %v757, 1e-05
      %v774 = vadd.f32 %v758, 1e-05
      %v775 = vadd.f32 %v759, 1e-05
      %v776 = vadd.f32 %v760, 1e-05
      %v777 = vadd.f32 %v761, 1e-05
      %v778 = vadd.f32 %v762, 1e-05
      %v779 = vadd.f32 %v763, 1e-05
      %v780 = vadd.f32 %v764, 1e-05
      %v781 = vadd.f32 %v765, 1e-05
      %v782 = vadd.f32 %v766, 1e-05
      %v783 = vadd.f32 %v767, 1e-05
      %v784 = vadd.f32 %v768, 1e-05
      %v785 = vadd.f32 %v769, 1e-05
      %v786 = vrsqrt.pop %v770
      %v787 = vrsqrt.pop %v771
      %v788 = vrsqrt.pop %v772
      %v789 = vrsqrt.pop %v773
      %v790 = vrsqrt.pop %v774
      %v791 = vrsqrt.pop %v775
      %v792 = vrsqrt.pop %v776
      %v793 = vrsqrt.pop %v777
      %v794 = vrsqrt.pop %v778
      %v795 = vrsqrt.pop %v779
      %v796 = vrsqrt.pop %v780
      %v797 = vrsqrt.pop %v781
      %v798 = vrsqrt.pop %v782
      %v799 = vrsqrt.pop %v783
      %v800 = vrsqrt.pop %v784
      %v801 = vrsqrt.pop %v785
      %v802 = vmul.f32 %v690, %v786
      %v803 = vmul.f32 %v691, %v787
      %v804 = vmul.f32 %v692, %v788
      %v805 = vmul.f32 %v693, %v789
      %v806 = vmul.f32 %v694, %v790
      %v807 = vmul.f32 %v695, %v791
      %v808 = vmul.f32 %v696, %v792
      %v809 = vmul.f32 %v697, %v793
      %v810 = vmul.f32 %v698, %v794
      %v811 = vmul.f32 %v699, %v795
      %v812 = vmul.f32 %v700, %v796
      %v813 = vmul.f32 %v701, %v797
      %v814 = vmul.f32 %v702, %v798
      %v815 = vmul.f32 %v703, %v799
      %v816 = vmul.f32 %v704, %v800
      %v817 = vmul.f32 %v705, %v801
      %v818 = vlaneseq
      %v819 = vshrl.u32 %v818, 7
      %v820 = vsub.s32 0, %v819
      %v821 = vrot.slane %v603, %v820
      %v822 = vmul.f32 %v802, %v821
      %v823 = vmul.f32 %v803, %v821
      %v824 = vmul.f32 %v804, %v821
      %v825 = vmul.f32 %v805, %v821
      %v826 = vmul.f32 %v806, %v821
      %v827 = vmul.f32 %v807, %v821
      %v828 = vmul.f32 %v808, %v821
      %v829 = vmul.f32 %v809, %v821
      %v830 = vmul.f32 %v810, %v821
      %v831 = vmul.f32 %v811, %v821
      %v832 = vmul.f32 %v812, %v821
      %v833 = vmul.f32 %v813, %v821
      %v834 = vmul.f32 %v814, %v821
      %v835 = vmul.f32 %v815, %v821
      %v836 = vmul.f32 %v816, %v821
      %v837 = vmul.f32 %v817, %v821
      %v838 = vlaneseq
      %v839 = vshrl.u32 %v838, 7
      %v840 = vsub.s32 0, %v839
      %v841 = vrot.slane %v604, %v840
      %v842 = vadd.f32 %v822, %v841
      %v843 = vadd.f32 %v823, %v841
      %v844 = vadd.f32 %v824, %v841
      %v845 = vadd.f32 %v825, %v841
      %v846 = vadd.f32 %v826, %v841
      %v847 = vadd.f32 %v827, %v841
      %v848 = vadd.f32 %v828, %v841
      %v849 = vadd.f32 %v829, %v841
      %v850 = vadd.f32 %v830, %v841
      %v851 = vadd.f32 %v831, %v841
      %v852 = vadd.f32 %v832, %v841
      %v853 = vadd.f32 %v833, %v841
      %v854 = vadd.f32 %v834, %v841
      %v855 = vadd.f32 %v835, %v841
      %v856 = vadd.f32 %v836, %v841
      %v857 = vadd.f32 %v837, %v841
      %858 = vst [vmem:[#allocation6] sm:$0xff] %v842
      %859 = vst [vmem:[#allocation6 + $0x8] sm:$0xff] %v843
      %860 = vst [vmem:[#allocation6 + $0x10] sm:$0xff] %v844
      %861 = vst [vmem:[#allocation6 + $0x18] sm:$0xff] %v845
      %862 = vst [vmem:[#allocation6 + $0x20] sm:$0xff] %v846
      %863 = vst [vmem:[#allocation6 + $0x28] sm:$0xff] %v847
      %864 = vst [vmem:[#allocation6 + $0x30] sm:$0xff] %v848
      %865 = vst [vmem:[#allocation6 + $0x38] sm:$0xff] %v849
      %866 = vst [vmem:[#allocation6 + $0x40] sm:$0xff] %v850
      %867 = vst [vmem:[#allocation6 + $0x48] sm:$0xff] %v851
      %868 = vst [vmem:[#allocation6 + $0x50] sm:$0xff] %v852
      %869 = vst [vmem:[#allocation6 + $0x58] sm:$0xff] %v853
      %870 = vst [vmem:[#allocation6 + $0x60] sm:$0xff] %v854
      %871 = vst [vmem:[#allocation6 + $0x68] sm:$0xff] %v855
      %872 = vst [vmem:[#allocation6 + $0x70] sm:$0xff] %v856
      %873 = vst [vmem:[#allocation6 + $0x78] sm:$0xff] %v857
    $region33: #{tpu_custom_call.1} parent=1 // pred_fallthru
      _
    // Predicated region
    $region34: #{tpu_custom_call.1} parent=1 // pred_check
      _
    $region35: #{tpu_custom_call.1} parent=1 // pred_check_branch
      %875 = sbr.rel (0) target = $region37
    $region36: #{tpu_custom_call.1} parent=1 // pred_region
      %s877 = ssub.s32 2048, 2048
      %878 = vsyncadd [#allocation5], %s877
      %s879 = sshll.u32 [#allocation6], 4
      %s880 = int_to_ptr.vmem [resolvable:$true] %s879
      %885 = dma.vmem_to_hbm [thread:$0]  %s880, 2048, %s5, [#allocation5], 128, 128, 8
    $region37: #{tpu_custom_call.1} parent=1 // pred_fallthru
      _
    // Predicated region
    $region38: #{tpu_custom_call.1} parent=1 // pred_check
      _
    $region39: #{tpu_custom_call.1} parent=1 // pred_check_branch
      %887 = sbr.rel (0) target = $region41
    $region40: #{tpu_custom_call.1} parent=1 // pred_region
      %888 = dma.done [#allocation5], 2048
    $region41: #{tpu_custom_call.1} parent=1 // pred_fallthru
      _
    %889 = vsyncpa [#allocation4], 1
    %890 = vsyncpa [#allocation5], 1

</llo_original>
